<compile_context>
chip_gen: v7x
topology: tpu7x:2x2x1
jax: 0.10.0
libtpu: 0.0.40
codegen_flags: <defaults>
</compile_context>

<pallas_src>
import functools

import jax
import jax.numpy as jnp
from jax import lax
from jax.experimental import pallas as pl
from jax.experimental.pallas import tpu as pltpu

_MIB = 1024 * 1024


def _chip_profile():
    """Returns (cores_for_parallel_grid, vmem_byte_budget, vmem_limit_bytes|None)."""
    kind = ""
    try:
        dev = jax.devices()[0]
        if getattr(dev, "platform", "") == "tpu":
            kind = (getattr(dev, "device_kind", "") or "").lower()
    except Exception:
        pass
    if "v7" in kind or "7x" in kind:
        # 2 TensorCores/chip, only 64 MiB physical VMEM -> smaller budget.
        return 2, 40 * _MIB, 56 * _MIB
    if "v6" in kind:
        return 1, 64 * _MIB, 96 * _MIB          # 128 MiB physical, 1 TC
    if "v5 lite" in kind or "v5e" in kind or "v5lite" in kind:
        return 1, 56 * _MIB, 96 * _MIB          # 128 MiB physical, 16 MiB default scoped
    if "v5" in kind:
        return 2, 64 * _MIB, 96 * _MIB          # v5p megacore
    if "v4" in kind:
        return 2, 48 * _MIB, 80 * _MIB          # megacore
    if "v2" in kind or "v3" in kind:
        return 1, 8 * _MIB, None
    return 1, 12 * _MIB, None                   # unknown: conservative


def _ral_kernel(logits_ref, targets_ref, out_ref, *,
                gamma_pos, gamma_neg, lambda_hill,
                tile_n, n_valid, needs_mask):
    part = pl.program_id(0)          # megacore partition ("parallel")
    step = pl.program_id(1)          # batch-tile index within partition ("arbitrary")
    steps_per_part = pl.num_programs(1)

    @pl.when(step == 0)
    def _():
        out_ref[...] = jnp.zeros_like(out_ref)

    x = logits_ref[...].astype(jnp.float32)           # (TN, C)
    t = targets_ref[...]                              # (TN, 1) int32
    tn, c = x.shape

    # Numerically-stable softmax pieces; exp(shifted) is the ONLY full-tile EUP
    # op and is reused for both p and logp (log / reciprocal are per-row only).
    m = jnp.max(x, axis=1, keepdims=True)
    shifted = x - m
    exp_shifted = jnp.exp(shifted)
    sumexp = jnp.sum(exp_shifted, axis=1, keepdims=True)
    inv_sum = pl.reciprocal(sumexp, approx=False)     # exact, per-row
    p = exp_shifted * inv_sum                         # softmax probs
    logp = shifted - jnp.log(sumexp)                  # log-softmax

    # one-hot(targets) via a (1, C) lane iota compared against the (TN, 1)
    # target column (both broadcasts are native); kept as a bool mask.
    cls = lax.broadcasted_iota(jnp.int32, (1, c), 1)
    is_tgt = cls == t                                 # (TN, C)

    # Positive weight (1 - onehot)^gamma_pos, simplified at trace time.
    gp = float(gamma_pos)
    if gp == 0.0:
        pos_w = jnp.float32(1.0)                      # torch.pow(0., 0.) == 1
    elif gp > 0.0:
        pos_w = jnp.where(is_tgt, 0.0, 1.0)           # exact: onehot in {0, 1}
    else:
        pos_w = jnp.power(jnp.where(is_tgt, 0.0, 1.0), gp)

    # Hill term: lambda - onehot * p, fused into a single select.
    hill = jnp.where(is_tgt, lambda_hill - p, lambda_hill)

    # (1 - p)^gamma_neg without EUP for small integer exponents (default 1.0).
    gn = float(gamma_neg)
    if gn == 0.0:
        neg_w = jnp.float32(1.0)
    elif gn == int(gn) and 1 <= int(gn) <= 4:
        omp = 1.0 - p
        neg_w = omp
        for _ in range(int(gn) - 1):
            neg_w = neg_w * omp
    else:
        neg_w = jnp.power(1.0 - p, gn)

    # Full per-element contribution; rows and classes are summed jointly.
    term = (pos_w + hill * neg_w) * logp              # (TN, C)

    def accumulate(v):
        out_ref[...] = out_ref[...] + jnp.sum(v, axis=0, keepdims=True).reshape(1, 1, c)

    if needs_mask:
        # Only the single global-last block contains out-of-range rows; gate
        # the mask with pl.when so all other steps pay zero extra VPU work.
        gblk = part * steps_per_part + step
        last_blk = pl.num_programs(0) * steps_per_part - 1
        is_boundary = gblk == last_blk

        @pl.when(is_boundary)
        def _():
            rid = gblk * tile_n + lax.broadcasted_iota(jnp.int32, (tn, 1), 0)
            accumulate(jnp.where(rid < n_valid, term, 0.0))

        @pl.when(jnp.logical_not(is_boundary))
        def _():
            accumulate(term)
    else:
        accumulate(term)


def robust_asymmetric_loss(logits, targets, *,
                           gamma_pos=2.0, gamma_neg=1.0, lambda_hill=1.5,
                           tile_n=None, num_parts=None):
    """logits: (N, C) float (f32 or bf16); targets: (N,) int. Returns scalar f32."""
    n, c = logits.shape
    itemsize = jnp.dtype(logits.dtype).itemsize
    row_align = {4: 8, 2: 16, 1: 32}.get(itemsize, 8)

    cores, vmem_budget, vmem_limit = _chip_profile()

    # Tiny-batch corner case only (N < 8/16 rows): pad to one aligned block.
    # For all realistic N there is NO wrapper-side copy of logits.
    n_rows = n
    logits_in = logits
    targets_in = targets.astype(jnp.int32)
    if n < row_align:
        pad = row_align - n
        logits_in = jnp.pad(logits_in, ((0, pad), (0, 0)))
        targets_in = jnp.pad(targets_in, ((0, pad),))
        n_rows = row_align
    targets2d = targets_in.reshape(n_rows, 1)

    # ---- byte-budgeted tile size -------------------------------------------
    # VMEM bytes per row of a block:
    #   2x logits block (double-buffered, lane-padded to >=128)
    # + 2x (tile_n, 1) int32 targets block (lane-padded to 128)
    # + ~6-8 tile-sized f32 temporaries (shifted/exp/p/logp/mask/term...).
    c_pad = max(128, pl.cdiv(c, 128) * 128)
    n_tmp = 7 if itemsize >= 4 else 8
    bytes_per_row = (2 * c_pad * itemsize) + (2 * 128 * 4) + (n_tmp * c_pad * 4)

    if tile_n is None:
        tile_n = vmem_budget // max(1, bytes_per_row)
    tile_n = int(tile_n)
    tile_n = min(tile_n, (n_rows // row_align) * row_align)   # keep blocks within the batch
    tile_n = (tile_n // row_align) * row_align
    tile_n = max(row_align, min(tile_n, 32768))

    total_blocks = pl.cdiv(n_rows, tile_n)

    # Megacore partitioning: 2 only on multi-core parts (v7x / v4 / v5p) and
    # only when the block count splits evenly (no wasted padded tiles).
    if num_parts is None:
        num_parts = 2 if (cores >= 2 and total_blocks >= 2 and total_blocks % 2 == 0) else 1
    num_parts = max(1, int(num_parts))
    if total_blocks % num_parts != 0:
        num_parts = 1
    steps_per_part = total_blocks // num_parts

    needs_mask = (n_rows % tile_n != 0) or (n_rows != n)

    kernel = functools.partial(
        _ral_kernel,
        gamma_pos=float(gamma_pos),
        gamma_neg=float(gamma_neg),
        lambda_hill=float(lambda_hill),
        tile_n=tile_n,
        n_valid=n,
        needs_mask=needs_mask,
    )

    cp_kwargs = dict(dimension_semantics=("parallel", "arbitrary"))
    if vmem_limit is not None:
        cp_kwargs["vmem_limit_bytes"] = int(vmem_limit)

    partials = pl.pallas_call(
        kernel,
        out_shape=jax.ShapeDtypeStruct((num_parts, 1, c), jnp.float32),
        grid_spec=pltpu.PrefetchScalarGridSpec(
            num_scalar_prefetch=0,
            grid=(num_parts, steps_per_part),
            in_specs=[
                pl.BlockSpec((tile_n, c),
                             lambda p, i, spp=steps_per_part: (p * spp + i, 0)),
                pl.BlockSpec((tile_n, 1),
                             lambda p, i, spp=steps_per_part: (p * spp + i, 0)),
            ],
            out_specs=pl.BlockSpec((1, 1, c), lambda p, i: (p, 0, 0)),
        ),
        compiler_params=pltpu.CompilerParams(**cp_kwargs),
    )(logits_in, targets2d)

    # Final cross-lane reduction, negate, mean — tiny, done once in the wrapper.
    return -jnp.sum(partials) / jnp.float32(n)


def _reference(logits, targets, gamma_pos=2.0, gamma_neg=1.0, lambda_hill=1.5):
    # Plain-JAX reference mirroring the PyTorch forward.
    c = logits.shape[1]
    oh = jax.nn.one_hot(targets, c, dtype=jnp.float32)
    p = jax.nn.softmax(logits.astype(jnp.float32), axis=1)
    logp = jnp.log(p)
    pos = jnp.sum((1.0 - oh) ** gamma_pos * logp, axis=1)
    hill = lambda_hill - oh * p
    neg = jnp.sum(hill * (1.0 - p) ** gamma_neg * logp, axis=1)
    return -jnp.mean(pos + neg)


if __name__ == "__main__":
    key = jax.random.PRNGKey(0)
    k1, k2 = jax.random.split(key)
    N, C = 50, 32
    logits = jax.random.normal(k1, (N, C), dtype=jnp.float32)
    targets = jax.random.randint(k2, (N,), 0, C, dtype=jnp.int32)

    ref = _reference(logits, targets)

    # Small explicit tile: exercises multi-step accumulation, the (possible)
    # two-partition grid, and the partial-final-block row mask (50 % 16 != 0).
    loss = robust_asymmetric_loss(logits, targets, tile_n=16)
    jax.block_until_ready(loss)
    assert jnp.allclose(loss, ref, rtol=1e-4, atol=1e-4), (loss, ref)

    # Default auto-tiled path (no wrapper-side padding / copy of logits).
    loss2 = robust_asymmetric_loss(logits, targets)
    jax.block_until_ready(loss2)
    assert jnp.allclose(loss2, ref, rtol=1e-4, atol=1e-4), (loss2, ref)

    print("KERNEL_OK")
</pallas_src>

<mosaic_0001>
module attributes {stable_mosaic.version = 11 : i64} {
  func.func @_ral_kernel(%arg0: i32, %arg1: i32, %arg2: memref<16x32xf32, #tpu.memory_space<vmem>>, %arg3: memref<16x1xi32, #tpu.memory_space<vmem>>, %arg4: memref<1x1x32xf32, #tpu.memory_space<vmem>>) attributes {dimension_semantics = [#tpu.dimension_semantics<parallel>, #tpu.dimension_semantics<arbitrary>], iteration_bounds = array<i64: 1, 4>, scalar_prefetch = 0 : i64, scratch_operands = 0 : i64, tpu.core_type = #tpu.core_type<tc>, window_params = [{transform_indices = @transform_0, window_bounds = array<i64: 16, 32>}, {transform_indices = @transform_1, window_bounds = array<i64: 16, 1>}, {transform_indices = @transform_2, window_bounds = array<i64: 1, 1, 32>}]} {
    %c0_i32 = arith.constant 0 : i32
    %0 = arith.cmpi eq, %arg1, %c0_i32 : i32
    %1 = arith.extui %0 : i1 to i32
    %c0_i32_0 = arith.constant 0 : i32
    %2 = arith.cmpi ne, %1, %c0_i32_0 : i32
    scf.if %2 {
      %cst_12 = arith.constant 0.000000e+00 : f32
      %42 = vector.broadcast %cst_12 : f32 to vector<1x1x32xf32>
      %c0_13 = arith.constant 0 : index
      %c0_14 = arith.constant 0 : index
      %c0_15 = arith.constant 0 : index
      %43 = vector.load %arg4[%c0_13, %c0_14, %c0_15] : memref<1x1x32xf32, #tpu.memory_space<vmem>>, vector<1x1x32xf32>
      tpu.vector_store %arg4[%c0_13, %c0_14, %c0_15], %42 {strides = array<i32>} : memref<1x1x32xf32, #tpu.memory_space<vmem>>, vector<1x1x32xf32>,
    } else {
    }
    %c0 = arith.constant 0 : index
    %c0_1 = arith.constant 0 : index
    %3 = vector.load %arg2[%c0, %c0_1] : memref<16x32xf32, #tpu.memory_space<vmem>>, vector<16x32xf32>
    %c0_2 = arith.constant 0 : index
    %c0_3 = arith.constant 0 : index
    %4 = vector.load %arg3[%c0_2, %c0_3] : memref<16x1xi32, #tpu.memory_space<vmem>>, vector<16x1xi32>
    %cst = arith.constant dense<0xFF800000> : vector<16xf32>
    %5 = vector.multi_reduction <maximumf>, %3, %cst [1] : vector<16x32xf32> to vector<16xf32>
    %6 = vector.shape_cast %5 : vector<16xf32> to vector<16x1xf32>
    %7 = vector.broadcast %6 : vector<16x1xf32> to vector<16x32xf32>
    %8 = arith.subf %3, %7 : vector<16x32xf32>
    %9 = math.exp %8 : vector<16x32xf32>
    %cst_4 = arith.constant dense<0.000000e+00> : vector<16xf32>
    %10 = vector.multi_reduction <add>, %9, %cst_4 [1] : vector<16x32xf32> to vector<16xf32>
    %11 = vector.shape_cast %10 : vector<16xf32> to vector<16x1xf32>
    %12 = tpu.reciprocal %11 : vector<16x1xf32> -> vector<16x1xf32>
    %13 = vector.broadcast %12 : vector<16x1xf32> to vector<16x32xf32>
    %14 = arith.mulf %9, %13 : vector<16x32xf32>
    %15 = math.log %11 : vector<16x1xf32>
    %16 = vector.broadcast %15 : vector<16x1xf32> to vector<16x32xf32>
    %17 = arith.subf %8, %16 : vector<16x32xf32>
    %18 = tpu.iota {dimensions = array<i32: 1>} : vector<1x32xi32>
    %19 = vector.broadcast %18 : vector<1x32xi32> to vector<16x32xi32>
    %20 = vector.broadcast %4 : vector<16x1xi32> to vector<16x32xi32>
    %21 = arith.cmpi eq, %19, %20 : vector<16x32xi32>
    %cst_5 = arith.constant 0.000000e+00 : f32
    %cst_6 = arith.constant 1.000000e+00 : f32
    %22 = vector.broadcast %cst_5 : f32 to vector<16x32xf32>
    %23 = vector.broadcast %cst_6 : f32 to vector<16x32xf32>
    %24 = arith.select %21, %22, %23 : vector<16x32xi1>, vector<16x32xf32>
    %cst_7 = arith.constant 1.500000e+00 : f32
    %25 = vector.broadcast %cst_7 : f32 to vector<16x32xf32>
    %26 = arith.subf %25, %14 : vector<16x32xf32>
    %cst_8 = arith.constant 1.500000e+00 : f32
    %27 = vector.broadcast %cst_8 : f32 to vector<16x32xf32>
    %28 = arith.select %21, %26, %27 : vector<16x32xi1>, vector<16x32xf32>
    %cst_9 = arith.constant 1.000000e+00 : f32
    %29 = vector.broadcast %cst_9 : f32 to vector<16x32xf32>
    %30 = arith.subf %29, %14 : vector<16x32xf32>
    %31 = arith.mulf %28, %30 : vector<16x32xf32>
    %32 = arith.addf %24, %31 : vector<16x32xf32>
    %33 = arith.mulf %32, %17 : vector<16x32xf32>
    %c4_i32 = arith.constant 4 : i32
    %34 = arith.muli %arg0, %c4_i32 : i32
    %35 = arith.addi %34, %arg1 : i32
    %c3_i32 = arith.constant 3 : i32
    %36 = arith.cmpi eq, %35, %c3_i32 : i32
    %37 = arith.extui %36 : i1 to i32
    %c0_i32_10 = arith.constant 0 : i32
    %38 = arith.cmpi ne, %37, %c0_i32_10 : i32
    scf.if %38 {
      %c16_i32 = arith.constant 16 : i32
      %42 = arith.muli %35, %c16_i32 : i32
      %43 = tpu.iota {dimensions = array<i32: 0>} : vector<16x1xi32>
      %44 = vector.broadcast %42 : i32 to vector<16x1xi32>
      %45 = arith.addi %44, %43 : vector<16x1xi32>
      %c50_i32 = arith.constant 50 : i32
      %46 = vector.broadcast %c50_i32 : i32 to vector<16x1xi32>
      %47 = arith.cmpi slt, %45, %46 : vector<16x1xi32>
      %cst_12 = arith.constant 0.000000e+00 : f32
      %48 = vector.shape_cast %47 : vector<16x1xi1> to vector<16x1xi1>
      %49 = vector.broadcast %48 : vector<16x1xi1> to vector<16x32xi1>
      %50 = vector.broadcast %cst_12 : f32 to vector<16x32xf32>
      %51 = arith.select %49, %33, %50 : vector<16x32xi1>, vector<16x32xf32>
      %c0_13 = arith.constant 0 : index
      %c0_14 = arith.constant 0 : index
      %c0_15 = arith.constant 0 : index
      %52 = vector.load %arg4[%c0_13, %c0_14, %c0_15] : memref<1x1x32xf32, #tpu.memory_space<vmem>>, vector<1x1x32xf32>
      %cst_16 = arith.constant dense<0.000000e+00> : vector<32xf32>
      %53 = vector.multi_reduction <add>, %51, %cst_16 [0] : vector<16x32xf32> to vector<32xf32>
      %54 = vector.shape_cast %53 : vector<32xf32> to vector<1x32xf32>
      %55 = vector.shape_cast %54 : vector<1x32xf32> to vector<1x1x32xf32>
      %56 = arith.addf %52, %55 : vector<1x1x32xf32>
      %c0_17 = arith.constant 0 : index
      %c0_18 = arith.constant 0 : index
      %c0_19 = arith.constant 0 : index
      %57 = vector.load %arg4[%c0_17, %c0_18, %c0_19] : memref<1x1x32xf32, #tpu.memory_space<vmem>>, vector<1x1x32xf32>
      tpu.vector_store %arg4[%c0_17, %c0_18, %c0_19], %56 {strides = array<i32>} : memref<1x1x32xf32, #tpu.memory_space<vmem>>, vector<1x1x32xf32>,
    } else {
    }
    %true = arith.constant true
    %39 = arith.xori %36, %true : i1
    %40 = arith.extui %39 : i1 to i32
    %c0_i32_11 = arith.constant 0 : i32
    %41 = arith.cmpi ne, %40, %c0_i32_11 : i32
    scf.if %41 {
      %c0_12 = arith.constant 0 : index
      %c0_13 = arith.constant 0 : index
      %c0_14 = arith.constant 0 : index
      %42 = vector.load %arg4[%c0_12, %c0_13, %c0_14] : memref<1x1x32xf32, #tpu.memory_space<vmem>>, vector<1x1x32xf32>
      %cst_15 = arith.constant dense<0.000000e+00> : vector<32xf32>
      %43 = vector.multi_reduction <add>, %33, %cst_15 [0] : vector<16x32xf32> to vector<32xf32>
      %44 = vector.shape_cast %43 : vector<32xf32> to vector<1x32xf32>
      %45 = vector.shape_cast %44 : vector<1x32xf32> to vector<1x1x32xf32>
      %46 = arith.addf %42, %45 : vector<1x1x32xf32>
      %c0_16 = arith.constant 0 : index
      %c0_17 = arith.constant 0 : index
      %c0_18 = arith.constant 0 : index
      %47 = vector.load %arg4[%c0_16, %c0_17, %c0_18] : memref<1x1x32xf32, #tpu.memory_space<vmem>>, vector<1x1x32xf32>
      tpu.vector_store %arg4[%c0_16, %c0_17, %c0_18], %46 {strides = array<i32>} : memref<1x1x32xf32, #tpu.memory_space<vmem>>, vector<1x1x32xf32>,
    } else {
    }
    return
  }
  func.func @transform_0(%arg0: i32, %arg1: i32) -> (i32, i32) {
    %c4_i32 = arith.constant 4 : i32
    %0 = arith.muli %arg0, %c4_i32 : i32
    %1 = arith.addi %0, %arg1 : i32
    %c0_i32 = arith.constant 0 : i32
    %c0_i32_0 = arith.constant 0 : i32
    return %1, %c0_i32 : i32, i32
  }
  func.func @transform_1(%arg0: i32, %arg1: i32) -> (i32, i32) {
    %c4_i32 = arith.constant 4 : i32
    %0 = arith.muli %arg0, %c4_i32 : i32
    %1 = arith.addi %0, %arg1 : i32
    %c0_i32 = arith.constant 0 : i32
    %c0_i32_0 = arith.constant 0 : i32
    return %1, %c0_i32 : i32, i32
  }
  func.func @transform_2(%arg0: i32, %arg1: i32) -> (i32, i32, i32) {
    %c0_i32 = arith.constant 0 : i32
    %c0_i32_0 = arith.constant 0 : i32
    %c0_i32_1 = arith.constant 0 : i32
    return %arg0, %c0_i32, %c0_i32_0 : i32, i32, i32
  }
}

</mosaic_0001>

<llo_original>
// kernel: tpu_custom_call.1
$region0: #{tpu_custom_call.1}
  #allocation0 [shape = 'u32[]', space=smem, size = 0x4, offset = 0x4, fixed_abs, tag = 'smem constant byte address 0x4 - core index']
  #allocation1 [shape = 'u32[144,128]{1,0:T(1,128)}', space=vmem, size = 0x12000, scoped, tag = 'internal scratch']
  %s0 = inlined_call_operand.vmem [shape: f32[50,32], index: 0, kind: input, shape index: {}]
  %s1 = inlined_call_operand.vmem [shape: s32[50,1], index: 1, kind: input, shape index: {}]
  %s2 = inlined_call_operand.hbm [shape: f32[1,1,32], index: 2, kind: output, shape index: {}]
  %s3 = sld [smem:[#allocation0]]
  $region53: #{tpu_custom_call.1} parent=0
    _
  %s5 = ssub.s32 1, %s3
  %s6 = scalar_select 0, %s5, %s3
  $region1: #{tpu_custom_call.1} parent=0
    #allocation2 [shape = 'u8[512]{0}', space=vmem, size = 0x400, scoped, tag = 'output window, operand 0, single buffered']
    #allocation3 [shape = 's32[2]{0}', space=sflag, size = 0x8, scoped, tag = 'scoped memory for tpu_custom_call.1']
    %7 = vsyncpa [#allocation3], 0
    loop: start=0, step=1, limit=6
    $region2: #{tpu_custom_call.1} parent=1 // loop_pre_header
      _
    $region3: #{tpu_custom_call.1} parent=1 // loop_header
      %s9 = sphi 0, %s13
      %p10 = scmp.ge.s32.totalorder %s9, 6
      %s16 = sphi 0, %s28
      %s17 = sphi 0, %s24
      %s18 = sphi 0, %s16
      %s19 = sphi 0, %s17
      %s20 = sphi 0, %s18
      %s21 = sphi 0, %s19
      %s35 = sphi 0, %s37
      %s38 = sphi 0, %s35
      %s39 = sphi 0, %s38
      %s55 = sphi 0, %s39
      %s65 = sphi 0, %s67
      %s68 = sphi 0, %s65
      %s69 = sphi 0, %s68
      %s85 = sphi 0, %s69
      %s91 = sphi 0, %s93
      %s94 = sphi 0, %s91
      %s95 = sphi 0, %s94
      %s111 = sphi 0, %s95
    $region4: #{tpu_custom_call.1} parent=1 // loop_header_branch
      %12 = sbr.rel (%p10) target = $region8
    $region5: #{tpu_custom_call.1} parent=1 // loop_body
      %s14 = ssub.s32 %s9, 1
      %s15 = ssub.s32 %s9, 2
      %s22 = sadd.s32 1, %s17
      %p23 = scmp.ge.s32.totalorder %s22, 4
      %s24 = scalar_select %p23, 0, %s22
      %s25 = sadd.s32 1, %s16
      %s26 = scalar_select %p23, %s25, %s16
      %p27 = scmp.ge.s32.totalorder %s26, 1
      %s28 = scalar_select %p27, 0, %s26
      %s29 = smul.u32 %s16, 4
      %s30 = sadd.s32 %s29, %s17
      %s31 = smul.u32 %s28, 4
      %s32 = sadd.s32 %s31, %s24
      %s33 = ssub.s32 %s30, %s32
      %p34 = scmp.eq.s32.totalorder %s33, 0
      %s36 = sadd.s32 %s35, 1
      %s37 = scalar_select %p34, %s35, %s36
      %p40 = pneg %p34
      %p41 = scmp.eq.s32.totalorder %s9, 3
      %p42 = por %p40, %p41
      %p43 = scmp.ne.s32.totalorder %s35, %s38
      %p44 = scmp.eq.s32.totalorder %s9, 0
      %p45 = por %p43, %p44
      %p46 = scmp.ne.s32.totalorder %s35, %s38
      %p47 = scmp.eq.s32.totalorder %s14, 3
      %p48 = por %p46, %p47
      %p49 = scmp.ne.s32.totalorder %s38, %s39
      %p50 = scmp.eq.s32.totalorder %s14, 0
      %p51 = por %p49, %p50
      %p52 = scmp.ne.s32.totalorder %s38, %s39
      %p53 = scmp.eq.s32.totalorder %s15, 3
      %p54 = por %p52, %p53
      %p56 = scmp.ne.s32.totalorder %s39, %s55
      %p57 = scmp.eq.s32.totalorder %s15, 0
      %p58 = por %p56, %p57
      %s59 = smul.u32 %s16, 4
      %s60 = sadd.s32 %s59, %s17
      %s61 = smul.u32 %s28, 4
      %s62 = sadd.s32 %s61, %s24
      %s63 = ssub.s32 %s60, %s62
      %p64 = scmp.eq.s32.totalorder %s63, 0
      %s66 = sadd.s32 %s65, 1
      %s67 = scalar_select %p64, %s65, %s66
      %p70 = pneg %p64
      %p71 = scmp.eq.s32.totalorder %s9, 3
      %p72 = por %p70, %p71
      %p73 = scmp.ne.s32.totalorder %s65, %s68
      %p74 = scmp.eq.s32.totalorder %s9, 0
      %p75 = por %p73, %p74
      %p76 = scmp.ne.s32.totalorder %s65, %s68
      %p77 = scmp.eq.s32.totalorder %s14, 3
      %p78 = por %p76, %p77
      %p79 = scmp.ne.s32.totalorder %s68, %s69
      %p80 = scmp.eq.s32.totalorder %s14, 0
      %p81 = por %p79, %p80
      %p82 = scmp.ne.s32.totalorder %s68, %s69
      %p83 = scmp.eq.s32.totalorder %s15, 3
      %p84 = por %p82, %p83
      %p86 = scmp.ne.s32.totalorder %s69, %s85
      %p87 = scmp.eq.s32.totalorder %s15, 0
      %p88 = por %p86, %p87
      %s89 = ssub.s32 %s16, %s28
      %p90 = scmp.eq.s32.totalorder %s89, 0
      %s92 = sadd.s32 %s91, 1
      %s93 = scalar_select %p90, %s91, %s92
      %p96 = pneg %p90
      %p97 = scmp.eq.s32.totalorder %s9, 3
      %p98 = por %p96, %p97
      %p99 = scmp.ne.s32.totalorder %s91, %s94
      %p100 = scmp.eq.s32.totalorder %s9, 0
      %p101 = por %p99, %p100
      %p102 = scmp.ne.s32.totalorder %s91, %s94
      %p103 = scmp.eq.s32.totalorder %s14, 3
      %p104 = por %p102, %p103
      %p105 = scmp.ne.s32.totalorder %s94, %s95
      %p106 = scmp.eq.s32.totalorder %s14, 0
      %p107 = por %p105, %p106
      %p108 = scmp.ne.s32.totalorder %s94, %s95
      %p109 = scmp.eq.s32.totalorder %s15, 3
      %p110 = por %p108, %p109
      %p112 = scmp.ne.s32.totalorder %s95, %s111
      %p113 = scmp.eq.s32.totalorder %s15, 0
      %p114 = por %p112, %p113
      %p115 = scmp.le.s32.totalorder 1, %s9
      %p116 = scmp.lt.s32.totalorder %s9, 5
      %p117 = pnand %p115, %p116
      %p118 = pneg %p117
      // Predicated region
      $region9: #{tpu_custom_call.1} parent=5 // pred_check
        _
      $region10: #{tpu_custom_call.1} parent=5 // pred_check_branch
        %120 = sbr.rel (%p117) target = $region12
      $region11: #{tpu_custom_call.1} parent=5 // pred_region
        %s121 = ssub.s32 %s9, 1
      $region12: #{tpu_custom_call.1} parent=5 // pred_fallthru
        _
      %p122 = scmp.lt.s32.totalorder %s9, 4
      // Predicated region
      $region13: #{tpu_custom_call.1} parent=5 // pred_check
        %p123 = pneg %p122
      $region14: #{tpu_custom_call.1} parent=5 // pred_check_branch
        %125 = sbr.rel (%p123) target = $region16
      $region15: #{tpu_custom_call.1} parent=5 // pred_region
        // Predicated region
        $region17: #{tpu_custom_call.1} parent=15 // pred_check
          %p126 = pneg %p45
        $region18: #{tpu_custom_call.1} parent=15 // pred_check_branch
          %128 = sbr.rel (%p126) target = $region20
        $region19: #{tpu_custom_call.1} parent=15 // pred_region
          %s129 = smul.u32 %s16, 4
          %s130 = sadd.s32 %s129, %s17
          %s131 = smul.u32 2, %s130
          %s132 = ssub.s32 7, %s131
          %p133 = scmp.lt.s32.totalorder %s132, 2
          %s134 = scalar_select %p133, %s132, 2
          %s135 = smul.u32 128, %s134
          %p136 = scmp.lt.s32.totalorder %s131, 6
          %s137 = scalar_select %p136, %s131, 6
          %s138 = smul.addr %s137, 8
          %s139 = scalar_lea.vmem %s0, %s138
          %s140 = smul.u32 %s16, 4
          %s141 = sadd.s32 %s140, %s17
          %s142 = smul.u32 2, %s141
          %s143 = ssub.s32 7, %s142
          %p144 = scmp.lt.s32.totalorder %s143, 2
          %s145 = scalar_select %p144, %s143, 2
          %s146 = smul.u32 128, %s145
        $region20: #{tpu_custom_call.1} parent=15 // pred_fallthru
          _
        // Predicated region
        $region21: #{tpu_custom_call.1} parent=15 // pred_check
          %p147 = pneg %p75
        $region22: #{tpu_custom_call.1} parent=15 // pred_check_branch
          %149 = sbr.rel (%p147) target = $region24
        $region23: #{tpu_custom_call.1} parent=15 // pred_region
          %s150 = smul.u32 %s16, 4
          %s151 = sadd.s32 %s150, %s17
          %s152 = smul.u32 2, %s151
          %s153 = ssub.s32 7, %s152
          %p154 = scmp.lt.s32.totalorder %s153, 2
          %s155 = scalar_select %p154, %s153, 2
          %s156 = smul.u32 128, %s155
          %p157 = scmp.lt.s32.totalorder %s152, 6
          %s158 = scalar_select %p157, %s152, 6
          %s159 = smul.addr %s158, 8
          %s160 = scalar_lea.vmem %s1, %s159
          %s161 = smul.u32 %s16, 4
          %s162 = sadd.s32 %s161, %s17
          %s163 = smul.u32 2, %s162
          %s164 = ssub.s32 7, %s163
          %p165 = scmp.lt.s32.totalorder %s164, 2
          %s166 = scalar_select %p165, %s164, 2
          %s167 = smul.u32 128, %s166
        $region24: #{tpu_custom_call.1} parent=15 // pred_fallthru
          _
      $region16: #{tpu_custom_call.1} parent=5 // pred_fallthru
        _
      %p168 = scmp.le.s32.totalorder 1, %s9
      %p169 = scmp.lt.s32.totalorder %s9, 5
      %p170 = pnand %p168, %p169
      %p171 = pneg %p170
      // Predicated region
      $region25: #{tpu_custom_call.1} parent=5 // pred_check
        _
      $region26: #{tpu_custom_call.1} parent=5 // pred_check_branch
        %173 = sbr.rel (%p170) target = $region28
      $region27: #{tpu_custom_call.1} parent=5 // pred_region
        %s174 = ssub.s32 %s9, 1
        %s175 = smul.u32 %s18, 4
        %s176 = sadd.s32 %s175, %s19
        %s177 = smul.u32 2, %s176
        %s178 = ssub.s32 7, %s177
        %p179 = scmp.lt.s32.totalorder %s178, 2
        %s180 = scalar_select %p179, %s178, 2
        %s181 = smul.u32 128, %s180
        %p182 = scmp.lt.s32.totalorder %s177, 6
        %s183 = scalar_select %p182, %s177, 6
        %s184 = smul.addr %s183, 8
        %s185 = scalar_lea.vmem %s0, %s184
        %p186 = pneg %p51
        %p187 = pneg %p48
        %s188 = smul.u32 %s18, 4
        %s189 = sadd.s32 %s188, %s19
        %s190 = smul.u32 2, %s189
        %s191 = ssub.s32 7, %s190
        %p192 = scmp.lt.s32.totalorder %s191, 2
        %s193 = scalar_select %p192, %s191, 2
        %s194 = smul.u32 128, %s193
        %p195 = scmp.lt.s32.totalorder %s190, 6
        %s196 = scalar_select %p195, %s190, 6
        %s197 = smul.addr %s196, 8
        %s198 = scalar_lea.vmem %s1, %s197
        %p199 = pneg %p81
        %p200 = pneg %p78
        %p201 = pneg %p107
        %p202 = pneg %p104
        %s203 = smul.u32 %s18, 4
        %s204 = sadd.s32 %s203, %s19
        %s205 = smul.u32 2, %s204
        %s206 = ssub.s32 7, %s205
        %p207 = scmp.lt.s32.totalorder %s206, 2
        %s208 = scalar_select %p207, %s206, 2
        %s209 = smul.u32 128, %s208
        %p210 = scmp.lt.s32.totalorder %s205, 6
        %s211 = scalar_select %p210, %s205, 6
        %s212 = smul.addr %s211, 8
        %s213 = scalar_lea.vmem %s0, %s212
        %s214 = smul.u32 %s18, 4
        %s215 = sadd.s32 %s214, %s19
        %s216 = smul.u32 2, %s215
        %s217 = ssub.s32 7, %s216
        %p218 = scmp.lt.s32.totalorder %s217, 2
        %s219 = scalar_select %p218, %s217, 2
        %s220 = smul.u32 128, %s219
        %s221 = smul.u32 %s18, 4
        %s222 = sadd.s32 %s221, %s19
        %s223 = smul.u32 2, %s222
        %s224 = ssub.s32 7, %s223
        %p225 = scmp.lt.s32.totalorder %s224, 2
        %s226 = scalar_select %p225, %s224, 2
        %s227 = smul.u32 128, %s226
        %p228 = scmp.lt.s32.totalorder %s223, 6
        %s229 = scalar_select %p228, %s223, 6
        %s230 = smul.addr %s229, 8
        %s231 = scalar_lea.vmem %s1, %s230
        %s232 = smul.u32 %s18, 4
        %s233 = sadd.s32 %s232, %s19
        %s234 = smul.u32 2, %s233
        %s235 = ssub.s32 7, %s234
        %p236 = scmp.lt.s32.totalorder %s235, 2
        %s237 = scalar_select %p236, %s235, 2
        %s238 = smul.u32 128, %s237
        %p239 = scmp.eq.s32.totalorder %s19, 0
        // Predicated region
        $region29: #{tpu_custom_call.1} parent=27 // pred_check
          %p240 = pneg %p239
        $region30: #{tpu_custom_call.1} parent=27 // pred_check_branch
          %242 = sbr.rel (%p240) target = $region32
        $region31: #{tpu_custom_call.1} parent=27 // pred_region
          %vm243 = vcmask 253952
          %244 = vst.msk [vmem:[#allocation2] sm:$0x1] %vm243, 0.0
        $region32: #{tpu_custom_call.1} parent=27 // pred_fallthru
          _
        %v245 = vld [vmem:[%s213] sm:$0xff]
        %v246 = vld [vmem:[%s213 + $0x8] sm:$0xff]
        %v247 = vld [vmem:[%s231] sm:$0xff]
        %v248 = vld [vmem:[%s231 + $0x8] sm:$0xff]
        %vm249 = vcmask 261120
        %v250 = vsel %vm249, %v245, -inf
        %251 = vmax.xlane.f32.xlu0 %v250
        %v252 = vpop.xlane.xlu0 %251
        %v253 = vsel %vm249, %v246, -inf
        %254 = vmax.xlane.f32.xlu0 %v253
        %v255 = vpop.xlane.xlu0 %254
        %v256 = vsub.f32 %v245, %v252
        %v257 = vsub.f32 %v246, %v255
        %v258 = vmul.f32 %v256, 1.442695
        %v259 = vpow.pop %v258
        %v260 = vmul.f32 %v257, 1.442695
        %v261 = vpow.pop %v260
        %v262 = vsel %vm249, %v259, 0.0
        %263 = vadd.xlane.f32.xlu0 %v262
        %v264 = vpop.xlane.xlu0 %263
        %v265 = vsel %vm249, %v261, 0.0
        %266 = vadd.xlane.f32.xlu0 %v265
        %v267 = vpop.xlane.xlu0 %266
        %v268 = vrcp.pop %v264
        %v269 = vrcp.pop %v267
        %v270 = vmul.f32 %v259, %v268
        %v271 = vmul.f32 %v261, %v269
        %v272 = vlog2.pop %v264
        %v273 = vmul.f32 %v272, 0.6931472
        %v274 = vlog2.pop %v267
        %v275 = vmul.f32 %v274, 0.6931472
        %v276 = vsub.f32 %v256, %v273
        %v277 = vsub.f32 %v257, %v275
        %v278 = vlaneseq
        %v279 = vand.u32 %v278, 127
        %280 = vset.pattern.permute.xlu0 0
        %281 = vperm.xlu0 %280, %v247
        %v282 = vpop.permute.xlu0 %281
        %283 = vset.pattern.permute.xlu0 0
        %284 = vperm.xlu0 %283, %v248
        %v285 = vpop.permute.xlu0 %284
        %vm286 = vcmp.eq.s32.totalorder %v279, %v282
        %vm287 = vcmp.eq.s32.totalorder %v279, %v285
        %v288 = vsel %vm286, 0.0, 1.0
        %v289 = vsel %vm287, 0.0, 1.0
        %v290 = vsub.f32 1.5, %v270
        %v291 = vsub.f32 1.5, %v271
        %v292 = vsel %vm286, %v290, 1.5
        %v293 = vsel %vm287, %v291, 1.5
        %v294 = vsub.f32 1.0, %v270
        %v295 = vsub.f32 1.0, %v271
        %v296 = vmul.f32 %v292, %v294
        %v297 = vmul.f32 %v293, %v295
        %v298 = vadd.f32 %v288, %v296
        %v299 = vadd.f32 %v289, %v297
        %v300 = vmul.f32 %v298, %v276
        %v301 = vmul.f32 %v299, %v277
        %s302 = smul.u32 %s18, 4
        %s303 = sadd.s32 %s302, %s19
        %p304 = scmp.eq.s32.totalorder %s303, 3
        // Predicated region
        $region33: #{tpu_custom_call.1} parent=27 // pred_check
          %p305 = pneg %p304
        $region34: #{tpu_custom_call.1} parent=27 // pred_check_branch
          %307 = sbr.rel (%p305) target = $region36
        $region35: #{tpu_custom_call.1} parent=27 // pred_region
          %s308 = smul.u32 %s303, 16
          %v309 = vlaneseq
          %v310 = vshrl.u32 %v309, 7
          %v311 = vadd.s32 %v310, 8
          %v312 = vstv %s308
          %v313 = vadd.s32 %v312, %v310
          %v314 = vadd.s32 %v312, %v311
          %vm315 = vcmp.lt.s32.totalorder %v313, 50
          %vm316 = vcmp.lt.s32.totalorder %v314, 50
          %v317 = vsel %vm315, 1, 0
          %v318 = vsel %vm316, 1, 0
          %vm319 = vcmp.eq.s32.totalorder %v317, 1
          %vm320 = vcmp.eq.s32.totalorder %v318, 1
          %v321 = vsel %vm319, %v300, 0.0
          %v322 = vsel %vm320, %v301, 0.0
          %v323 = vld [vmem:[#allocation2] sm:$0x1]
          %v324 = vsel %vm249, %v321, 0.0
          %v325 = vsel %vm249, %v322, 0.0
          %v326 = vadd.f32 %v324, %v325
          %v327 = vrot.slane %v326, 4
          %v328 = vadd.f32 %v326, %v327
          %v329 = vrot.slane %v328, 2
          %v330 = vadd.f32 %v328, %v329
          %v331 = vrot.slane %v330, 1
          %v332 = vadd.f32 %v330, %v331
          %v333 = vadd.f32 %v323, %v332
          %vm334 = vcmask 253952
          %335 = vst.msk [vmem:[#allocation2] sm:$0x1] %vm334, %v333
        $region36: #{tpu_custom_call.1} parent=27 // pred_fallthru
          _
        %p336 = scmp.ne.s32.totalorder %s303, 3
        // Predicated region
        $region37: #{tpu_custom_call.1} parent=27 // pred_check
          %p337 = pneg %p336
        $region38: #{tpu_custom_call.1} parent=27 // pred_check_branch
          %339 = sbr.rel (%p337) target = $region40
        $region39: #{tpu_custom_call.1} parent=27 // pred_region
          %v340 = vld [vmem:[#allocation2] sm:$0x1]
          %v341 = vsel %vm249, %v300, 0.0
          %v342 = vsel %vm249, %v301, 0.0
          %v343 = vadd.f32 %v341, %v342
          %v344 = vrot.slane %v343, 4
          %v345 = vadd.f32 %v343, %v344
          %v346 = vrot.slane %v345, 2
          %v347 = vadd.f32 %v345, %v346
          %v348 = vrot.slane %v347, 1
          %v349 = vadd.f32 %v347, %v348
          %v350 = vadd.f32 %v340, %v349
          %vm351 = vcmask 253952
          %352 = vst.msk [vmem:[#allocation2] sm:$0x1] %vm351, %v350
        $region40: #{tpu_custom_call.1} parent=27 // pred_fallthru
          _
        // Predicated region
        $region41: #{tpu_custom_call.1} parent=27 // pred_check
          %p353 = pneg %p104
        $region42: #{tpu_custom_call.1} parent=27 // pred_check_branch
          %355 = sbr.rel (%p353) target = $region44
        $region43: #{tpu_custom_call.1} parent=27 // pred_region
          %s357 = ssub.s32 16, 16
          %358 = vsyncadd [#allocation3], %s357
          %s359 = smul.addr %s18, 16
          %s360 = scalar_lea.hbm %s2, %s359
          %s362 = sshll.u32 [#allocation2], 4
          %s363 = int_to_ptr.vmem [resolvable:$true] %s362
          %365 = dma.vmem_to_hbm [thread:$0]  %s363, 16, %s360, [#allocation3]
        $region44: #{tpu_custom_call.1} parent=27 // pred_fallthru
          _
        // Predicated region
        $region45: #{tpu_custom_call.1} parent=27 // pred_check
          %p366 = pneg %p104
        $region46: #{tpu_custom_call.1} parent=27 // pred_check_branch
          %368 = sbr.rel (%p366) target = $region48
        $region47: #{tpu_custom_call.1} parent=27 // pred_region
          %369 = dma.done [#allocation3], 16
        $region48: #{tpu_custom_call.1} parent=27 // pred_fallthru
          _
      $region28: #{tpu_custom_call.1} parent=5 // pred_fallthru
        _
      %p370 = scmp.le.s32.totalorder 2, %s9
      // Predicated region
      $region49: #{tpu_custom_call.1} parent=5 // pred_check
        %p371 = pneg %p370
      $region50: #{tpu_custom_call.1} parent=5 // pred_check_branch
        %373 = sbr.rel (%p371) target = $region52
      $region51: #{tpu_custom_call.1} parent=5 // pred_region
        %s374 = ssub.s32 %s9, 2
      $region52: #{tpu_custom_call.1} parent=5 // pred_fallthru
        _
    $region6: #{tpu_custom_call.1} parent=1 // loop_footer
      %s13 = sadd.s32 1, %s9
    $region7: #{tpu_custom_call.1} parent=1 // loop_footer_branch
      %8 = sbr.rel target = $region3
    $region8: #{tpu_custom_call.1} parent=1 // loop_exit
      _
    %375 = vsyncpa [#allocation3], 1
    %s376 = scalar_lea.sflag [#allocation3], 1
    %377 = vsyncpa %s376, 1

</llo_original>
